<compile_context>
chip_gen: v5e
topology: v5e:2x2
jax: 0.10.0
libtpu: 0.0.40
codegen_flags: <defaults>
</compile_context>

<pallas_src>
import jax
import jax.numpy as jnp
import numpy as np
from jax.experimental import pallas as pl
from jax.experimental.pallas import tpu as pltpu


def _bilinear_matrix(in_size: int, out_size: int) -> np.ndarray:
    """Interpolation matrix A (out_size, in_size) such that out = A @ in matches
    PyTorch bilinear interpolation with align_corners=False along one axis."""
    scale = in_size / out_size
    dst = np.arange(out_size, dtype=np.float64)
    src = (dst + 0.5) * scale - 0.5
    src = np.maximum(src, 0.0)                       # PyTorch clamps negatives to 0
    lo = np.minimum(np.floor(src).astype(np.int64), in_size - 1)
    hi = np.minimum(lo + 1, in_size - 1)
    lam = src - lo
    A = np.zeros((out_size, in_size), dtype=np.float64)
    A[np.arange(out_size), lo] += 1.0 - lam
    A[np.arange(out_size), hi] += lam
    return A


def _upscale_kernel(x_ref, bh_ref, cwt_ref, bias_ref, o_ref):
    # x_ref:    (1, H, W)     single-channel input image
    # bh_ref:   (3, Ho, H)    row operators (rows kh..kh+Ho of zero-padded A_h)
    # cwt_ref:  (3, W, Wo)    column operators with the conv's kw taps folded in
    # bias_ref: (1,)  SMEM    conv bias (scalar)
    # o_ref:    (1, Ho, Wo)
    x = x_ref[0]                                             # (H, W)
    acc = jnp.zeros(o_ref.shape[1:], jnp.float32)            # (Ho, Wo), lane-dense
    for kh in range(bh_ref.shape[0]):                        # unrolled, 3 taps
        t = jnp.dot(x, cwt_ref[kh], preferred_element_type=jnp.float32)       # (H, Wo)
        acc = acc + jnp.dot(bh_ref[kh], t, preferred_element_type=jnp.float32)  # (Ho, Wo)
    o_ref[0] = acc + bias_ref[0]                             # single-pass store


def upscale(x, conv_weight, conv_bias, *, factor):
    """Forward of Upscale. x: (N, 1, H, W); conv_weight: (1, 1, 3, 3); conv_bias: (1,)."""
    N, C, H, W = x.shape
    assert C == 1 and conv_weight.shape == (1, 1, 3, 3) and conv_bias.shape == (1,)
    K = 3
    Ho, Wo = H * factor, W * factor

    # --- host-side, data-independent operator construction (done once at init
    # in a real model; kept here so the wrapper is self-contained) ------------
    ah = _bilinear_matrix(H, Ho)                     # (Ho, H)
    aw = _bilinear_matrix(W, Wo)                     # (Wo, W)
    ah_ext = np.zeros((Ho + 2, H)); ah_ext[1:-1] = ah    # zero rows = conv padding
    aw_ext = np.zeros((Wo + 2, W)); aw_ext[1:-1] = aw
    bh = np.stack([ah_ext[kh:kh + Ho] for kh in range(K)])   # (3, Ho, H)
    bw = np.stack([aw_ext[kw:kw + Wo] for kw in range(K)])   # (3, Wo, W)

    # Fold conv kw taps into the column operator (tiny, jit-safe jnp ops).
    w_taps = conv_weight[0, 0].astype(jnp.float32)           # (3, 3)
    bw_j = jnp.asarray(bw, dtype=jnp.float32)
    cw = jnp.einsum("hk,kow->how", w_taps, bw_j)             # (3, Wo, W)
    cwt = jnp.transpose(cw, (0, 2, 1))                       # (3, W, Wo)

    x3 = x.reshape(N, H, W).astype(jnp.float32)              # free reshape (C == 1)
    bh_j = jnp.asarray(bh, dtype=jnp.float32)
    bias_j = conv_bias.astype(jnp.float32).reshape(1)

    out = pl.pallas_call(
        _upscale_kernel,
        out_shape=jax.ShapeDtypeStruct((N, Ho, Wo), jnp.float32),
        grid=(N,),
        in_specs=[
            pl.BlockSpec((1, H, W), lambda i: (i, 0, 0)),
            pl.BlockSpec((K, Ho, H), lambda i: (0, 0, 0)),
            pl.BlockSpec((K, W, Wo), lambda i: (0, 0, 0)),
            pl.BlockSpec(memory_space=pltpu.MemorySpace.SMEM),
        ],
        out_specs=pl.BlockSpec((1, Ho, Wo), lambda i: (i, 0, 0)),
        compiler_params=pltpu.CompilerParams(
            dimension_semantics=("parallel",)),
    )(x3, bh_j, cwt, bias_j)

    return out.reshape(N, 1, Ho, Wo)                         # free reshape back


# ---------------------- independent reference (gather-based) -----------------
def _bilinear_upsample_ref(x, factor):
    N, C, H, W = x.shape
    Ho, Wo = H * factor, W * factor

    def src_idx(out_size, in_size):
        scale = in_size / out_size
        s = (jnp.arange(out_size, dtype=jnp.float32) + 0.5) * scale - 0.5
        s = jnp.maximum(s, 0.0)
        lo = jnp.clip(jnp.floor(s).astype(jnp.int32), 0, in_size - 1)
        hi = jnp.minimum(lo + 1, in_size - 1)
        lam = s - lo.astype(jnp.float32)
        return lo, hi, lam

    hlo, hhi, hlam = src_idx(Ho, H)
    wlo, whi, wlam = src_idx(Wo, W)
    xh = (x[:, :, hlo, :] * (1.0 - hlam)[None, None, :, None]
          + x[:, :, hhi, :] * hlam[None, None, :, None])
    return (xh[:, :, :, wlo] * (1.0 - wlam)[None, None, None, :]
            + xh[:, :, :, whi] * wlam[None, None, None, :])


def _reference(x, factor, conv_weight, conv_bias):
    up = _bilinear_upsample_ref(x, factor)
    conv = jax.lax.conv_general_dilated(
        up, conv_weight, window_strides=(1, 1), padding=((1, 1), (1, 1)),
        dimension_numbers=("NCHW", "OIHW", "NCHW"))
    return conv + conv_bias.reshape(1, -1, 1, 1)


if __name__ == "__main__":
    key = jax.random.PRNGKey(0)
    k_x, k_w, k_b = jax.random.split(key, 3)

    # Small shapes; W*factor = 128 keeps the output minor dim lane-dense.
    N, C, H, W = 2, 1, 64, 64
    factor = 2

    x = jax.random.normal(k_x, (N, C, H, W), dtype=jnp.float32)
    # nn.Conv2d(1, 1, 3, 1, 1): weight (1,1,3,3) and bias (1,)
    conv_w = jax.random.normal(k_w, (1, 1, 3, 3), dtype=jnp.float32) * 0.2
    conv_b = jax.random.normal(k_b, (1,), dtype=jnp.float32) * 0.1

    out = upscale(x, conv_w, conv_b, factor=factor)
    out = jax.block_until_ready(out)

    ref = _reference(x, factor, conv_w, conv_b)
    np.testing.assert_allclose(np.asarray(out), np.asarray(ref),
                               rtol=1e-4, atol=1e-4)
    assert out.shape == (N, 1, H * factor, W * factor)
    print("KERNEL_OK")
</pallas_src>

<mosaic_0001>
module attributes {stable_mosaic.version = 11 : i64} {
  func.func @_upscale_kernel(%arg0: i32, %arg1: memref<1x64x64xf32, #tpu.memory_space<vmem>>, %arg2: memref<3x128x64xf32, #tpu.memory_space<vmem>>, %arg3: memref<3x64x128xf32, #tpu.memory_space<vmem>>, %arg4: memref<1xf32, #tpu.memory_space<smem>>, %arg5: memref<1x128x128xf32, #tpu.memory_space<vmem>>) attributes {dimension_semantics = [#tpu.dimension_semantics<parallel>], iteration_bounds = array<i64: 2>, scalar_prefetch = 0 : i64, scratch_operands = 0 : i64, tpu.core_type = #tpu.core_type<tc>, window_params = [{transform_indices = @transform_0, window_bounds = array<i64: 1, 64, 64>}, {pipeline_mode = #tpu.pipeline_mode<synchronous>, transform_indices = @transform_1, window_bounds = array<i64: 3, 128, 64>}, {pipeline_mode = #tpu.pipeline_mode<synchronous>, transform_indices = @transform_2, window_bounds = array<i64: 3, 64, 128>}, {transform_indices = @transform_3, window_bounds = array<i64: 1>}, {transform_indices = @transform_4, window_bounds = array<i64: 1, 128, 128>}]} {
    %c0 = arith.constant 0 : index
    %c0_0 = arith.constant 0 : index
    %c0_1 = arith.constant 0 : index
    %0 = vector.load %arg1[%c0, %c0_0, %c0_1] : memref<1x64x64xf32, #tpu.memory_space<vmem>>, vector<1x64x64xf32>
    %1 = vector.shape_cast %0 : vector<1x64x64xf32> to vector<64x64xf32>
    %cst = arith.constant 0.000000e+00 : f32
    %2 = vector.broadcast %cst : f32 to vector<128x128xf32>
    %c0_2 = arith.constant 0 : index
    %c0_3 = arith.constant 0 : index
    %c0_4 = arith.constant 0 : index
    %3 = vector.load %arg3[%c0_2, %c0_3, %c0_4] : memref<3x64x128xf32, #tpu.memory_space<vmem>>, vector<1x64x128xf32>
    %4 = vector.shape_cast %3 : vector<1x64x128xf32> to vector<64x128xf32>
    %cst_5 = arith.constant dense<0.000000e+00> : vector<64x128xf32>
    %5 = tpu.matmul %1, %4, %cst_5 {dimension_numbers = #tpu.dot_dimension_numbers<[1], [0], [0], [1], [0, 0, 1, 1], [], []>} : vector<64x64xf32>, vector<64x128xf32>, vector<64x128xf32> -> vector<64x128xf32>
    %c0_6 = arith.constant 0 : index
    %c0_7 = arith.constant 0 : index
    %c0_8 = arith.constant 0 : index
    %6 = vector.load %arg2[%c0_6, %c0_7, %c0_8] : memref<3x128x64xf32, #tpu.memory_space<vmem>>, vector<1x128x64xf32>
    %7 = vector.shape_cast %6 : vector<1x128x64xf32> to vector<128x64xf32>
    %cst_9 = arith.constant dense<0.000000e+00> : vector<128x128xf32>
    %8 = tpu.matmul %7, %5, %cst_9 {dimension_numbers = #tpu.dot_dimension_numbers<[1], [0], [0], [1], [0, 0, 1, 1], [], []>} : vector<128x64xf32>, vector<64x128xf32>, vector<128x128xf32> -> vector<128x128xf32>
    %9 = arith.addf %2, %8 : vector<128x128xf32>
    %c1 = arith.constant 1 : index
    %c0_10 = arith.constant 0 : index
    %c0_11 = arith.constant 0 : index
    %10 = vector.load %arg3[%c1, %c0_10, %c0_11] : memref<3x64x128xf32, #tpu.memory_space<vmem>>, vector<1x64x128xf32>
    %11 = vector.shape_cast %10 : vector<1x64x128xf32> to vector<64x128xf32>
    %cst_12 = arith.constant dense<0.000000e+00> : vector<64x128xf32>
    %12 = tpu.matmul %1, %11, %cst_12 {dimension_numbers = #tpu.dot_dimension_numbers<[1], [0], [0], [1], [0, 0, 1, 1], [], []>} : vector<64x64xf32>, vector<64x128xf32>, vector<64x128xf32> -> vector<64x128xf32>
    %c1_13 = arith.constant 1 : index
    %c0_14 = arith.constant 0 : index
    %c0_15 = arith.constant 0 : index
    %13 = vector.load %arg2[%c1_13, %c0_14, %c0_15] : memref<3x128x64xf32, #tpu.memory_space<vmem>>, vector<1x128x64xf32>
    %14 = vector.shape_cast %13 : vector<1x128x64xf32> to vector<128x64xf32>
    %cst_16 = arith.constant dense<0.000000e+00> : vector<128x128xf32>
    %15 = tpu.matmul %14, %12, %cst_16 {dimension_numbers = #tpu.dot_dimension_numbers<[1], [0], [0], [1], [0, 0, 1, 1], [], []>} : vector<128x64xf32>, vector<64x128xf32>, vector<128x128xf32> -> vector<128x128xf32>
    %16 = arith.addf %9, %15 : vector<128x128xf32>
    %c2 = arith.constant 2 : index
    %c0_17 = arith.constant 0 : index
    %c0_18 = arith.constant 0 : index
    %17 = vector.load %arg3[%c2, %c0_17, %c0_18] : memref<3x64x128xf32, #tpu.memory_space<vmem>>, vector<1x64x128xf32>
    %18 = vector.shape_cast %17 : vector<1x64x128xf32> to vector<64x128xf32>
    %cst_19 = arith.constant dense<0.000000e+00> : vector<64x128xf32>
    %19 = tpu.matmul %1, %18, %cst_19 {dimension_numbers = #tpu.dot_dimension_numbers<[1], [0], [0], [1], [0, 0, 1, 1], [], []>} : vector<64x64xf32>, vector<64x128xf32>, vector<64x128xf32> -> vector<64x128xf32>
    %c2_20 = arith.constant 2 : index
    %c0_21 = arith.constant 0 : index
    %c0_22 = arith.constant 0 : index
    %20 = vector.load %arg2[%c2_20, %c0_21, %c0_22] : memref<3x128x64xf32, #tpu.memory_space<vmem>>, vector<1x128x64xf32>
    %21 = vector.shape_cast %20 : vector<1x128x64xf32> to vector<128x64xf32>
    %cst_23 = arith.constant dense<0.000000e+00> : vector<128x128xf32>
    %22 = tpu.matmul %21, %19, %cst_23 {dimension_numbers = #tpu.dot_dimension_numbers<[1], [0], [0], [1], [0, 0, 1, 1], [], []>} : vector<128x64xf32>, vector<64x128xf32>, vector<128x128xf32> -> vector<128x128xf32>
    %23 = arith.addf %16, %22 : vector<128x128xf32>
    %c0_24 = arith.constant 0 : index
    %24 = memref.load %arg4[%c0_24] : memref<1xf32, #tpu.memory_space<smem>>
    %25 = vector.broadcast %24 : f32 to vector<128x128xf32>
    %26 = arith.addf %23, %25 : vector<128x128xf32>
    %c0_25 = arith.constant 0 : index
    %c0_26 = arith.constant 0 : index
    %c0_27 = arith.constant 0 : index
    %27 = vector.load %arg5[%c0_25, %c0_26, %c0_27] : memref<1x128x128xf32, #tpu.memory_space<vmem>>, vector<1x128x128xf32>
    %28 = vector.shape_cast %27 : vector<1x128x128xf32> to vector<128x128xf32>
    %29 = vector.shape_cast %26 : vector<128x128xf32> to vector<1x128x128xf32>
    tpu.vector_store %arg5[%c0_25, %c0_26, %c0_27], %29 {strides = array<i32>} : memref<1x128x128xf32, #tpu.memory_space<vmem>>, vector<1x128x128xf32>,
    return
  }
  func.func @transform_0(%arg0: i32) -> (i32, i32, i32) {
    %c0_i32 = arith.constant 0 : i32
    %c0_i32_0 = arith.constant 0 : i32
    %c0_i32_1 = arith.constant 0 : i32
    return %arg0, %c0_i32, %c0_i32_0 : i32, i32, i32
  }
  func.func @transform_1(%arg0: i32) -> (i32, i32, i32) {
    %c0_i32 = arith.constant 0 : i32
    %c0_i32_0 = arith.constant 0 : i32
    %c0_i32_1 = arith.constant 0 : i32
    %c0_i32_2 = arith.constant 0 : i32
    return %c0_i32, %c0_i32_0, %c0_i32_1 : i32, i32, i32
  }
  func.func @transform_2(%arg0: i32) -> (i32, i32, i32) {
    %c0_i32 = arith.constant 0 : i32
    %c0_i32_0 = arith.constant 0 : i32
    %c0_i32_1 = arith.constant 0 : i32
    %c0_i32_2 = arith.constant 0 : i32
    return %c0_i32, %c0_i32_0, %c0_i32_1 : i32, i32, i32
  }
  func.func @transform_3(%arg0: i32) -> i32 {
    %c0_i32 = arith.constant 0 : i32
    %c0_i32_0 = arith.constant 0 : i32
    return %c0_i32 : i32
  }
  func.func @transform_4(%arg0: i32) -> (i32, i32, i32) {
    %c0_i32 = arith.constant 0 : i32
    %c0_i32_0 = arith.constant 0 : i32
    %c0_i32_1 = arith.constant 0 : i32
    return %arg0, %c0_i32, %c0_i32_0 : i32, i32, i32
  }
}

</mosaic_0001>

<llo_original>
// kernel: tpu_custom_call.1
$region0: #{tpu_custom_call.1}
  #allocation0 [shape = 'u32[]', space=smem, size = 0x4, offset = 0x4, fixed_abs, tag = 'smem constant byte address 0x4 - core index']
  #allocation1 [shape = 'u32[72,128]{1,0:T(1,128)}', space=vmem, size = 0x9000, scoped, tag = 'internal scratch']
  #allocation2 [shape = 'f32[1]{0:T(128)S(6)}', space=smem, size = 0x200, scoped, tag = 'scoped memory for tpu_custom_call.1']
  %s0 = inlined_call_operand.vmem [shape: f32[2,64,64], index: 0, kind: input, shape index: {}]
  %s1 = inlined_call_operand.vmem [shape: f32[3,128,64], index: 1, kind: input, shape index: {}]
  %s2 = inlined_call_operand.vmem [shape: f32[3,64,128], index: 2, kind: input, shape index: {}]
  %s3 = inlined_call_operand.<no memory space> [shape: f32[1], index: 3, kind: input, shape index: {}]
  %s4 = inlined_call_operand.hbm [shape: f32[2,128,128], index: 4, kind: output, shape index: {}]
  %s5 = sld [smem:[#allocation0]]
  $region49: #{tpu_custom_call.1} parent=0
    _
  %s7 = ssub.s32 1, %s5
  %s8 = scalar_select 0, %s7, %s5
  %9 = sst [smem:[#allocation2]] %s3
  $region1: #{tpu_custom_call.1} parent=0
    #allocation3 [shape = 'u8[131072]{0}', space=vmem, size = 0x20000, scoped, tag = 'output window, operand 0']
    #allocation4 [shape = 's32[2]{0}', space=sflag, size = 0x8, scoped, tag = 'scoped memory for tpu_custom_call.1']
    %10 = vsyncpa [#allocation4], 0
    %s11 = scalar_lea.sflag [#allocation4], 1
    %12 = vsyncpa %s11, 0
    loop: start=0, step=1, limit=4
    $region2: #{tpu_custom_call.1} parent=1 // loop_pre_header
      _
    $region3: #{tpu_custom_call.1} parent=1 // loop_header
      %s14 = sphi 0, %s18
      %p15 = scmp.ge.s32.totalorder %s14, 4
      %s24 = sphi 0, %s26
      %s27 = sphi 0, %s24
      %s28 = sphi 0, %s27
      %s44 = sphi 0, %s28
      %s48 = sphi 0, %s48
      %s50 = sphi 0, %s48
      %s51 = sphi 0, %s50
      %s65 = sphi 0, %s51
      %s69 = sphi 0, %s69
      %s71 = sphi 0, %s69
      %s72 = sphi 0, %s71
      %s86 = sphi 0, %s72
      %s90 = sphi 0, %s90
      %s92 = sphi 0, %s90
      %s93 = sphi 0, %s92
      %s107 = sphi 0, %s93
      %s113 = sphi 0, %s115
      %s116 = sphi 0, %s113
      %s117 = sphi 0, %s116
      %s133 = sphi 0, %s117
    $region4: #{tpu_custom_call.1} parent=1 // loop_header_branch
      %17 = sbr.rel (%p15) target = $region8
    $region5: #{tpu_custom_call.1} parent=1 // loop_body
      %s19 = ssub.s32 %s14, 1
      %s20 = ssub.s32 %s14, 2
      %s21 = sadd.s32 %s14, 1
      %s22 = ssub.s32 %s14, %s21
      %p23 = scmp.eq.s32.totalorder %s22, 0
      %s25 = sadd.s32 %s24, 1
      %s26 = scalar_select %p23, %s24, %s25
      %p29 = pneg %p23
      %p30 = scmp.eq.s32.totalorder %s14, 1
      %p31 = por %p29, %p30
      %p32 = scmp.ne.s32.totalorder %s24, %s27
      %p33 = scmp.eq.s32.totalorder %s14, 0
      %p34 = por %p32, %p33
      %p35 = scmp.ne.s32.totalorder %s24, %s27
      %p36 = scmp.eq.s32.totalorder %s19, 1
      %p37 = por %p35, %p36
      %p38 = scmp.ne.s32.totalorder %s27, %s28
      %p39 = scmp.eq.s32.totalorder %s19, 0
      %p40 = por %p38, %p39
      %p41 = scmp.ne.s32.totalorder %s27, %s28
      %p42 = scmp.eq.s32.totalorder %s20, 1
      %p43 = por %p41, %p42
      %p45 = scmp.ne.s32.totalorder %s28, %s44
      %p46 = scmp.eq.s32.totalorder %s20, 0
      %p47 = por %p45, %p46
      %s49 = sadd.s32 %s48, 1
      %p52 = scmp.eq.s32.totalorder %s14, 1
      %p53 = scmp.ne.s32.totalorder %s48, %s50
      %p54 = scmp.eq.s32.totalorder %s14, 0
      %p55 = por %p53, %p54
      %p56 = scmp.ne.s32.totalorder %s48, %s50
      %p57 = scmp.eq.s32.totalorder %s19, 1
      %p58 = por %p56, %p57
      %p59 = scmp.ne.s32.totalorder %s50, %s51
      %p60 = scmp.eq.s32.totalorder %s19, 0
      %p61 = por %p59, %p60
      %p62 = scmp.ne.s32.totalorder %s50, %s51
      %p63 = scmp.eq.s32.totalorder %s20, 1
      %p64 = por %p62, %p63
      %p66 = scmp.ne.s32.totalorder %s51, %s65
      %p67 = scmp.eq.s32.totalorder %s20, 0
      %p68 = por %p66, %p67
      %s70 = sadd.s32 %s69, 1
      %p73 = scmp.eq.s32.totalorder %s14, 1
      %p74 = scmp.ne.s32.totalorder %s69, %s71
      %p75 = scmp.eq.s32.totalorder %s14, 0
      %p76 = por %p74, %p75
      %p77 = scmp.ne.s32.totalorder %s69, %s71
      %p78 = scmp.eq.s32.totalorder %s19, 1
      %p79 = por %p77, %p78
      %p80 = scmp.ne.s32.totalorder %s71, %s72
      %p81 = scmp.eq.s32.totalorder %s19, 0
      %p82 = por %p80, %p81
      %p83 = scmp.ne.s32.totalorder %s71, %s72
      %p84 = scmp.eq.s32.totalorder %s20, 1
      %p85 = por %p83, %p84
      %p87 = scmp.ne.s32.totalorder %s72, %s86
      %p88 = scmp.eq.s32.totalorder %s20, 0
      %p89 = por %p87, %p88
      %s91 = sadd.s32 %s90, 1
      %p94 = scmp.eq.s32.totalorder %s14, 1
      %p95 = scmp.ne.s32.totalorder %s90, %s92
      %p96 = scmp.eq.s32.totalorder %s14, 0
      %p97 = por %p95, %p96
      %p98 = scmp.ne.s32.totalorder %s90, %s92
      %p99 = scmp.eq.s32.totalorder %s19, 1
      %p100 = por %p98, %p99
      %p101 = scmp.ne.s32.totalorder %s92, %s93
      %p102 = scmp.eq.s32.totalorder %s19, 0
      %p103 = por %p101, %p102
      %p104 = scmp.ne.s32.totalorder %s92, %s93
      %p105 = scmp.eq.s32.totalorder %s20, 1
      %p106 = por %p104, %p105
      %p108 = scmp.ne.s32.totalorder %s93, %s107
      %p109 = scmp.eq.s32.totalorder %s20, 0
      %p110 = por %p108, %p109
      %s111 = ssub.s32 %s14, %s21
      %p112 = scmp.eq.s32.totalorder %s111, 0
      %s114 = sadd.s32 %s113, 1
      %s115 = scalar_select %p112, %s113, %s114
      %p118 = pneg %p112
      %p119 = scmp.eq.s32.totalorder %s14, 1
      %p120 = por %p118, %p119
      %p121 = scmp.ne.s32.totalorder %s113, %s116
      %p122 = scmp.eq.s32.totalorder %s14, 0
      %p123 = por %p121, %p122
      %p124 = scmp.ne.s32.totalorder %s113, %s116
      %p125 = scmp.eq.s32.totalorder %s19, 1
      %p126 = por %p124, %p125
      %p127 = scmp.ne.s32.totalorder %s116, %s117
      %p128 = scmp.eq.s32.totalorder %s19, 0
      %p129 = por %p127, %p128
      %p130 = scmp.ne.s32.totalorder %s116, %s117
      %p131 = scmp.eq.s32.totalorder %s20, 1
      %p132 = por %p130, %p131
      %p134 = scmp.ne.s32.totalorder %s117, %s133
      %p135 = scmp.eq.s32.totalorder %s20, 0
      %p136 = por %p134, %p135
      %p137 = scmp.le.s32.totalorder 1, %s14
      %p138 = scmp.lt.s32.totalorder %s14, 3
      %p139 = pnand %p137, %p138
      %p140 = pneg %p139
      // Predicated region
      $region9: #{tpu_custom_call.1} parent=5 // pred_check
        _
      $region10: #{tpu_custom_call.1} parent=5 // pred_check_branch
        %142 = sbr.rel (%p139) target = $region12
      $region11: #{tpu_custom_call.1} parent=5 // pred_region
        %s143 = ssub.s32 %s14, 1
        // Predicated region
        $region13: #{tpu_custom_call.1} parent=11 // pred_check
          %p144 = pneg %p61
        $region14: #{tpu_custom_call.1} parent=11 // pred_check_branch
          %146 = sbr.rel (%p144) target = $region16
        $region15: #{tpu_custom_call.1} parent=11 // pred_region
          _
        $region16: #{tpu_custom_call.1} parent=11 // pred_fallthru
          _
        // Predicated region
        $region17: #{tpu_custom_call.1} parent=11 // pred_check
          %p147 = pneg %p82
        $region18: #{tpu_custom_call.1} parent=11 // pred_check_branch
          %149 = sbr.rel (%p147) target = $region20
        $region19: #{tpu_custom_call.1} parent=11 // pred_region
          _
        $region20: #{tpu_custom_call.1} parent=11 // pred_fallthru
          _
        // Predicated region
        $region21: #{tpu_custom_call.1} parent=11 // pred_check
          %p150 = pneg %p103
        $region22: #{tpu_custom_call.1} parent=11 // pred_check_branch
          %152 = sbr.rel (%p150) target = $region24
        $region23: #{tpu_custom_call.1} parent=11 // pred_region
          _
        $region24: #{tpu_custom_call.1} parent=11 // pred_fallthru
          _
      $region12: #{tpu_custom_call.1} parent=5 // pred_fallthru
        _
      %p153 = scmp.lt.s32.totalorder %s14, 2
      // Predicated region
      $region25: #{tpu_custom_call.1} parent=5 // pred_check
        %p154 = pneg %p153
      $region26: #{tpu_custom_call.1} parent=5 // pred_check_branch
        %156 = sbr.rel (%p154) target = $region28
      $region27: #{tpu_custom_call.1} parent=5 // pred_region
        // Predicated region
        $region29: #{tpu_custom_call.1} parent=27 // pred_check
          %p157 = pneg %p34
        $region30: #{tpu_custom_call.1} parent=27 // pred_check_branch
          %159 = sbr.rel (%p157) target = $region32
        $region31: #{tpu_custom_call.1} parent=27 // pred_region
          %p160 = scmp.lt.s32.totalorder %s14, 1
          %s161 = scalar_select %p160, %s14, 1
          %s162 = smul.addr %s161, 8
          %s163 = smul.addr %s162, 8
          %s164 = scalar_lea.vmem %s0, %s163
        $region32: #{tpu_custom_call.1} parent=27 // pred_fallthru
          _
      $region28: #{tpu_custom_call.1} parent=5 // pred_fallthru
        _
      %p165 = scmp.le.s32.totalorder 1, %s14
      %p166 = scmp.lt.s32.totalorder %s14, 3
      %p167 = pnand %p165, %p166
      %p168 = pneg %p167
      // Predicated region
      $region33: #{tpu_custom_call.1} parent=5 // pred_check
        _
      $region34: #{tpu_custom_call.1} parent=5 // pred_check_branch
        %170 = sbr.rel (%p167) target = $region36
      $region35: #{tpu_custom_call.1} parent=5 // pred_region
        %s171 = ssub.s32 %s14, 1
        %p172 = scmp.lt.s32.totalorder %s19, 1
        %s173 = scalar_select %p172, %s19, 1
        %s174 = smul.addr %s173, 8
        %s175 = smul.addr %s174, 8
        %s176 = scalar_lea.vmem %s0, %s175
        %p177 = pneg %p40
        %p178 = pneg %p37
        %p179 = pneg %p61
        %p180 = pneg %p58
        %p181 = pneg %p82
        %p182 = pneg %p79
        %p183 = pneg %p103
        %p184 = pneg %p100
        %p185 = pneg %p129
        %p186 = pneg %p126
        %s187 = sand.u32 %s116, 1
        %s188 = scalar_lea.sflag [#allocation4], %s187
        %s189 = sand.u32 %s116, 1
        %s190 = smul.addr %s189, 128
        %s191 = scalar_lea.vmem [#allocation3], %s190
        %p192 = scmp.lt.s32.totalorder %s19, 1
        %s193 = scalar_select %p192, %s19, 1
        %s194 = smul.addr %s193, 8
        %s195 = smul.addr %s194, 8
        %s196 = scalar_lea.vmem %s0, %s195
        %v197 = vld [vmem:[%s196] sm:$0xff]
        %v198 = vld [vmem:[%s196 + $0x8] sm:$0xff]
        %v199 = vld [vmem:[%s196 + $0x10] sm:$0xff]
        %v200 = vld [vmem:[%s196 + $0x18] sm:$0xff]
        %v201 = vld [vmem:[%s196 + $0x20] sm:$0xff]
        %v202 = vld [vmem:[%s196 + $0x28] sm:$0xff]
        %v203 = vld [vmem:[%s196 + $0x30] sm:$0xff]
        %v204 = vld [vmem:[%s196 + $0x38] sm:$0xff]
        %v205 = vld [vmem:[%s2] sm:$0xff]
        %v206 = vld [vmem:[%s2 + $0x8] sm:$0xff]
        %v207 = vld [vmem:[%s2 + $0x10] sm:$0xff]
        %v208 = vld [vmem:[%s2 + $0x18] sm:$0xff]
        %v209 = vld [vmem:[%s2 + $0x20] sm:$0xff]
        %v210 = vld [vmem:[%s2 + $0x28] sm:$0xff]
        %v211 = vld [vmem:[%s2 + $0x30] sm:$0xff]
        %v212 = vld [vmem:[%s2 + $0x38] sm:$0xff]
        %vm213 = vcmask 523264
        %v215 = vsel %vm213, %v197, 0
        %v218 = vsel %vm213, %v198, 0
        %v221 = vsel %vm213, %v199, 0
        %v224 = vsel %vm213, %v200, 0
        %v227 = vsel %vm213, %v201, 0
        %v230 = vsel %vm213, %v202, 0
        %v233 = vsel %vm213, %v203, 0
        %v236 = vsel %vm213, %v204, 0
        %238 = vmatpush.msra.mxu0 0.0
        %239 = vmatpush.msra.mxu0 0.0
        %240 = vmatpush.msra.mxu0 0.0
        %241 = vmatpush.msra.mxu0 0.0
        %242 = vmatpush.msra.mxu0 0.0
        %243 = vmatpush.msra.mxu0 0.0
        %244 = vmatpush.msra.mxu0 0.0
        %245 = vmatpush.msra.mxu0 0.0
        %246 = vmatpush.msra.mxu0 %v212
        %247 = vmatpush.msra.mxu0 %v211
        %248 = vmatpush.msra.mxu0 %v210
        %249 = vmatpush.msra.mxu0 %v209
        %250 = vmatpush.msra.mxu0 %v208
        %251 = vmatpush.msra.mxu0 %v207
        %252 = vmatpush.msra.mxu0 %v206
        %253 = vmatpush.msra.mxu0 %v205
        %254 = vmatmul.f32.gmra.mxu0 %v215
        %v255 = vpop.f32.mrf.mxu0
        %v256 = vadd.f32 0.0, %v255
        %257 = vmatmul.f32.gmra.mxu0 %v218
        %v258 = vpop.f32.mrf.mxu0
        %v259 = vadd.f32 0.0, %v258
        %260 = vmatmul.f32.gmra.mxu0 %v221
        %v261 = vpop.f32.mrf.mxu0
        %v262 = vadd.f32 0.0, %v261
        %263 = vmatmul.f32.gmra.mxu0 %v224
        %v264 = vpop.f32.mrf.mxu0
        %v265 = vadd.f32 0.0, %v264
        %266 = vmatmul.f32.gmra.mxu0 %v227
        %v267 = vpop.f32.mrf.mxu0
        %v268 = vadd.f32 0.0, %v267
        %269 = vmatmul.f32.gmra.mxu0 %v230
        %v270 = vpop.f32.mrf.mxu0
        %v271 = vadd.f32 0.0, %v270
        %272 = vmatmul.f32.gmra.mxu0 %v233
        %v273 = vpop.f32.mrf.mxu0
        %v274 = vadd.f32 0.0, %v273
        %275 = vmatmul.f32.gmra.mxu0 %v236
        %v276 = vpop.f32.mrf.mxu0
        %v277 = vadd.f32 0.0, %v276
        %278 = vdwg.mxu0
        %v279 = vld [vmem:[%s1] sm:$0xff]
        %v280 = vld [vmem:[%s1 + $0x8] sm:$0xff]
        %v281 = vld [vmem:[%s1 + $0x10] sm:$0xff]
        %v282 = vld [vmem:[%s1 + $0x18] sm:$0xff]
        %v283 = vld [vmem:[%s1 + $0x20] sm:$0xff]
        %v284 = vld [vmem:[%s1 + $0x28] sm:$0xff]
        %v285 = vld [vmem:[%s1 + $0x30] sm:$0xff]
        %v286 = vld [vmem:[%s1 + $0x38] sm:$0xff]
        %v287 = vld [vmem:[%s1 + $0x40] sm:$0xff]
        %v288 = vld [vmem:[%s1 + $0x48] sm:$0xff]
        %v289 = vld [vmem:[%s1 + $0x50] sm:$0xff]
        %v290 = vld [vmem:[%s1 + $0x58] sm:$0xff]
        %v291 = vld [vmem:[%s1 + $0x60] sm:$0xff]
        %v292 = vld [vmem:[%s1 + $0x68] sm:$0xff]
        %v293 = vld [vmem:[%s1 + $0x70] sm:$0xff]
        %v294 = vld [vmem:[%s1 + $0x78] sm:$0xff]
        %s295 = scalar_lea.vmem %s2, 64
        %v296 = vld [vmem:[%s295] sm:$0xff]
        %v297 = vld [vmem:[%s295 + $0x8] sm:$0xff]
        %v298 = vld [vmem:[%s295 + $0x10] sm:$0xff]
        %v299 = vld [vmem:[%s295 + $0x18] sm:$0xff]
        %v300 = vld [vmem:[%s295 + $0x20] sm:$0xff]
        %v301 = vld [vmem:[%s295 + $0x28] sm:$0xff]
        %v302 = vld [vmem:[%s295 + $0x30] sm:$0xff]
        %v303 = vld [vmem:[%s295 + $0x38] sm:$0xff]
        %304 = vmatpush.msra.mxu0 0.0
        %305 = vmatpush.msra.mxu0 0.0
        %306 = vmatpush.msra.mxu0 0.0
        %307 = vmatpush.msra.mxu0 0.0
        %308 = vmatpush.msra.mxu0 0.0
        %309 = vmatpush.msra.mxu0 0.0
        %310 = vmatpush.msra.mxu0 0.0
        %311 = vmatpush.msra.mxu0 0.0
        %312 = vmatpush.msra.mxu0 %v303
        %313 = vmatpush.msra.mxu0 %v302
        %314 = vmatpush.msra.mxu0 %v301
        %315 = vmatpush.msra.mxu0 %v300
        %316 = vmatpush.msra.mxu0 %v299
        %317 = vmatpush.msra.mxu0 %v298
        %318 = vmatpush.msra.mxu0 %v297
        %319 = vmatpush.msra.mxu0 %v296
        %320 = vmatmul.f32.gmra.mxu0 %v215
        %v321 = vpop.f32.mrf.mxu0
        %v322 = vadd.f32 0.0, %v321
        %323 = vmatmul.f32.gmra.mxu0 %v218
        %v324 = vpop.f32.mrf.mxu0
        %v325 = vadd.f32 0.0, %v324
        %326 = vmatmul.f32.gmra.mxu0 %v221
        %v327 = vpop.f32.mrf.mxu0
        %v328 = vadd.f32 0.0, %v327
        %329 = vmatmul.f32.gmra.mxu0 %v224
        %v330 = vpop.f32.mrf.mxu0
        %v331 = vadd.f32 0.0, %v330
        %332 = vmatmul.f32.gmra.mxu0 %v227
        %v333 = vpop.f32.mrf.mxu0
        %v334 = vadd.f32 0.0, %v333
        %335 = vmatmul.f32.gmra.mxu0 %v230
        %v336 = vpop.f32.mrf.mxu0
        %v337 = vadd.f32 0.0, %v336
        %338 = vmatmul.f32.gmra.mxu0 %v233
        %v339 = vpop.f32.mrf.mxu0
        %v340 = vadd.f32 0.0, %v339
        %341 = vmatmul.f32.gmra.mxu0 %v236
        %v342 = vpop.f32.mrf.mxu0
        %v343 = vadd.f32 0.0, %v342
        %344 = vdwg.mxu0
        %s345 = scalar_lea.vmem %s1, 128
        %v346 = vld [vmem:[%s345] sm:$0xff]
        %v347 = vld [vmem:[%s345 + $0x8] sm:$0xff]
        %v348 = vld [vmem:[%s345 + $0x10] sm:$0xff]
        %v349 = vld [vmem:[%s345 + $0x18] sm:$0xff]
        %v350 = vld [vmem:[%s345 + $0x20] sm:$0xff]
        %v351 = vld [vmem:[%s345 + $0x28] sm:$0xff]
        %v352 = vld [vmem:[%s345 + $0x30] sm:$0xff]
        %v353 = vld [vmem:[%s345 + $0x38] sm:$0xff]
        %v354 = vld [vmem:[%s345 + $0x40] sm:$0xff]
        %v355 = vld [vmem:[%s345 + $0x48] sm:$0xff]
        %v356 = vld [vmem:[%s345 + $0x50] sm:$0xff]
        %v357 = vld [vmem:[%s345 + $0x58] sm:$0xff]
        %v358 = vld [vmem:[%s345 + $0x60] sm:$0xff]
        %v359 = vld [vmem:[%s345 + $0x68] sm:$0xff]
        %v360 = vld [vmem:[%s345 + $0x70] sm:$0xff]
        %v361 = vld [vmem:[%s345 + $0x78] sm:$0xff]
        %v363 = vsel %vm213, %v346, 0
        %v366 = vsel %vm213, %v347, 0
        %v369 = vsel %vm213, %v348, 0
        %v372 = vsel %vm213, %v349, 0
        %v375 = vsel %vm213, %v350, 0
        %v378 = vsel %vm213, %v351, 0
        %v381 = vsel %vm213, %v352, 0
        %v384 = vsel %vm213, %v353, 0
        %v387 = vsel %vm213, %v354, 0
        %v390 = vsel %vm213, %v355, 0
        %v393 = vsel %vm213, %v356, 0
        %v396 = vsel %vm213, %v357, 0
        %v399 = vsel %vm213, %v358, 0
        %v402 = vsel %vm213, %v359, 0
        %v405 = vsel %vm213, %v360, 0
        %v408 = vsel %vm213, %v361, 0
        %410 = vmatpush.msra.mxu0 0.0
        %411 = vmatpush.msra.mxu0 0.0
        %412 = vmatpush.msra.mxu0 0.0
        %413 = vmatpush.msra.mxu0 0.0
        %414 = vmatpush.msra.mxu0 0.0
        %415 = vmatpush.msra.mxu0 0.0
        %416 = vmatpush.msra.mxu0 0.0
        %417 = vmatpush.msra.mxu0 0.0
        %418 = vmatpush.msra.mxu0 %v343
        %419 = vmatpush.msra.mxu0 %v340
        %420 = vmatpush.msra.mxu0 %v337
        %421 = vmatpush.msra.mxu0 %v334
        %422 = vmatpush.msra.mxu0 %v331
        %423 = vmatpush.msra.mxu0 %v328
        %424 = vmatpush.msra.mxu0 %v325
        %425 = vmatpush.msra.mxu0 %v322
        %426 = vmatmul.f32.gmra.mxu0 %v363
        %v427 = vpop.f32.mrf.mxu0
        %v428 = vadd.f32 0.0, %v427
        %429 = vmatmul.f32.gmra.mxu0 %v366
        %v430 = vpop.f32.mrf.mxu0
        %v431 = vadd.f32 0.0, %v430
        %432 = vmatmul.f32.gmra.mxu0 %v369
        %v433 = vpop.f32.mrf.mxu0
        %v434 = vadd.f32 0.0, %v433
        %435 = vmatmul.f32.gmra.mxu0 %v372
        %v436 = vpop.f32.mrf.mxu0
        %v437 = vadd.f32 0.0, %v436
        %438 = vmatmul.f32.gmra.mxu0 %v375
        %v439 = vpop.f32.mrf.mxu0
        %v440 = vadd.f32 0.0, %v439
        %441 = vmatmul.f32.gmra.mxu0 %v378
        %v442 = vpop.f32.mrf.mxu0
        %v443 = vadd.f32 0.0, %v442
        %444 = vmatmul.f32.gmra.mxu0 %v381
        %v445 = vpop.f32.mrf.mxu0
        %v446 = vadd.f32 0.0, %v445
        %447 = vmatmul.f32.gmra.mxu0 %v384
        %v448 = vpop.f32.mrf.mxu0
        %v449 = vadd.f32 0.0, %v448
        %450 = vmatmul.f32.gmra.mxu0 %v387
        %v451 = vpop.f32.mrf.mxu0
        %v452 = vadd.f32 0.0, %v451
        %453 = vmatmul.f32.gmra.mxu0 %v390
        %v454 = vpop.f32.mrf.mxu0
        %v455 = vadd.f32 0.0, %v454
        %456 = vmatmul.f32.gmra.mxu0 %v393
        %v457 = vpop.f32.mrf.mxu0
        %v458 = vadd.f32 0.0, %v457
        %459 = vmatmul.f32.gmra.mxu0 %v396
        %v460 = vpop.f32.mrf.mxu0
        %v461 = vadd.f32 0.0, %v460
        %462 = vmatmul.f32.gmra.mxu0 %v399
        %v463 = vpop.f32.mrf.mxu0
        %v464 = vadd.f32 0.0, %v463
        %465 = vmatmul.f32.gmra.mxu0 %v402
        %v466 = vpop.f32.mrf.mxu0
        %v467 = vadd.f32 0.0, %v466
        %468 = vmatmul.f32.gmra.mxu0 %v405
        %v469 = vpop.f32.mrf.mxu0
        %v470 = vadd.f32 0.0, %v469
        %471 = vmatmul.f32.gmra.mxu0 %v408
        %v472 = vpop.f32.mrf.mxu0
        %v473 = vadd.f32 0.0, %v472
        %474 = vdwg.mxu0
        %v476 = vsel %vm213, %v279, 0
        %v479 = vsel %vm213, %v280, 0
        %v482 = vsel %vm213, %v281, 0
        %v485 = vsel %vm213, %v282, 0
        %v488 = vsel %vm213, %v283, 0
        %v491 = vsel %vm213, %v284, 0
        %v494 = vsel %vm213, %v285, 0
        %v497 = vsel %vm213, %v286, 0
        %v500 = vsel %vm213, %v287, 0
        %v503 = vsel %vm213, %v288, 0
        %v506 = vsel %vm213, %v289, 0
        %v509 = vsel %vm213, %v290, 0
        %v512 = vsel %vm213, %v291, 0
        %v515 = vsel %vm213, %v292, 0
        %v518 = vsel %vm213, %v293, 0
        %v521 = vsel %vm213, %v294, 0
        %523 = vmatpush.msra.mxu0 0.0
        %524 = vmatpush.msra.mxu0 0.0
        %525 = vmatpush.msra.mxu0 0.0
        %526 = vmatpush.msra.mxu0 0.0
        %527 = vmatpush.msra.mxu0 0.0
        %528 = vmatpush.msra.mxu0 0.0
        %529 = vmatpush.msra.mxu0 0.0
        %530 = vmatpush.msra.mxu0 0.0
        %531 = vmatpush.msra.mxu0 %v277
        %532 = vmatpush.msra.mxu0 %v274
        %533 = vmatpush.msra.mxu0 %v271
        %534 = vmatpush.msra.mxu0 %v268
        %535 = vmatpush.msra.mxu0 %v265
        %536 = vmatpush.msra.mxu0 %v262
        %537 = vmatpush.msra.mxu0 %v259
        %538 = vmatpush.msra.mxu0 %v256
        %539 = vmatmul.f32.gmra.mxu0 %v476
        %v540 = vpop.f32.mrf.mxu0
        %v541 = vadd.f32 %v428, %v540
        %542 = vmatmul.f32.gmra.mxu0 %v479
        %v543 = vpop.f32.mrf.mxu0
        %v544 = vadd.f32 %v431, %v543
        %545 = vmatmul.f32.gmra.mxu0 %v482
        %v546 = vpop.f32.mrf.mxu0
        %v547 = vadd.f32 %v434, %v546
        %548 = vmatmul.f32.gmra.mxu0 %v485
        %v549 = vpop.f32.mrf.mxu0
        %v550 = vadd.f32 %v437, %v549
        %551 = vmatmul.f32.gmra.mxu0 %v488
        %v552 = vpop.f32.mrf.mxu0
        %v553 = vadd.f32 %v440, %v552
        %554 = vmatmul.f32.gmra.mxu0 %v491
        %v555 = vpop.f32.mrf.mxu0
        %v556 = vadd.f32 %v443, %v555
        %557 = vmatmul.f32.gmra.mxu0 %v494
        %v558 = vpop.f32.mrf.mxu0
        %v559 = vadd.f32 %v446, %v558
        %560 = vmatmul.f32.gmra.mxu0 %v497
        %v561 = vpop.f32.mrf.mxu0
        %v562 = vadd.f32 %v449, %v561
        %563 = vmatmul.f32.gmra.mxu0 %v500
        %v564 = vpop.f32.mrf.mxu0
        %v565 = vadd.f32 %v452, %v564
        %566 = vmatmul.f32.gmra.mxu0 %v503
        %v567 = vpop.f32.mrf.mxu0
        %v568 = vadd.f32 %v455, %v567
        %569 = vmatmul.f32.gmra.mxu0 %v506
        %v570 = vpop.f32.mrf.mxu0
        %v571 = vadd.f32 %v458, %v570
        %572 = vmatmul.f32.gmra.mxu0 %v509
        %v573 = vpop.f32.mrf.mxu0
        %v574 = vadd.f32 %v461, %v573
        %575 = vmatmul.f32.gmra.mxu0 %v512
        %v576 = vpop.f32.mrf.mxu0
        %v577 = vadd.f32 %v464, %v576
        %578 = vmatmul.f32.gmra.mxu0 %v515
        %v579 = vpop.f32.mrf.mxu0
        %v580 = vadd.f32 %v467, %v579
        %581 = vmatmul.f32.gmra.mxu0 %v518
        %v582 = vpop.f32.mrf.mxu0
        %v583 = vadd.f32 %v470, %v582
        %584 = vmatmul.f32.gmra.mxu0 %v521
        %v585 = vpop.f32.mrf.mxu0
        %v586 = vadd.f32 %v473, %v585
        %587 = vdwg.mxu0
        %s588 = scalar_lea.vmem %s2, 128
        %v589 = vld [vmem:[%s588] sm:$0xff]
        %v590 = vld [vmem:[%s588 + $0x8] sm:$0xff]
        %v591 = vld [vmem:[%s588 + $0x10] sm:$0xff]
        %v592 = vld [vmem:[%s588 + $0x18] sm:$0xff]
        %v593 = vld [vmem:[%s588 + $0x20] sm:$0xff]
        %v594 = vld [vmem:[%s588 + $0x28] sm:$0xff]
        %v595 = vld [vmem:[%s588 + $0x30] sm:$0xff]
        %v596 = vld [vmem:[%s588 + $0x38] sm:$0xff]
        %597 = vmatpush.msra.mxu0 0.0
        %598 = vmatpush.msra.mxu0 0.0
        %599 = vmatpush.msra.mxu0 0.0
        %600 = vmatpush.msra.mxu0 0.0
        %601 = vmatpush.msra.mxu0 0.0
        %602 = vmatpush.msra.mxu0 0.0
        %603 = vmatpush.msra.mxu0 0.0
        %604 = vmatpush.msra.mxu0 0.0
        %605 = vmatpush.msra.mxu0 %v596
        %606 = vmatpush.msra.mxu0 %v595
        %607 = vmatpush.msra.mxu0 %v594
        %608 = vmatpush.msra.mxu0 %v593
        %609 = vmatpush.msra.mxu0 %v592
        %610 = vmatpush.msra.mxu0 %v591
        %611 = vmatpush.msra.mxu0 %v590
        %612 = vmatpush.msra.mxu0 %v589
        %613 = vmatmul.f32.gmra.mxu0 %v215
        %v614 = vpop.f32.mrf.mxu0
        %v615 = vadd.f32 0.0, %v614
        %616 = vmatmul.f32.gmra.mxu0 %v218
        %v617 = vpop.f32.mrf.mxu0
        %v618 = vadd.f32 0.0, %v617
        %619 = vmatmul.f32.gmra.mxu0 %v221
        %v620 = vpop.f32.mrf.mxu0
        %v621 = vadd.f32 0.0, %v620
        %622 = vmatmul.f32.gmra.mxu0 %v224
        %v623 = vpop.f32.mrf.mxu0
        %v624 = vadd.f32 0.0, %v623
        %625 = vmatmul.f32.gmra.mxu0 %v227
        %v626 = vpop.f32.mrf.mxu0
        %v627 = vadd.f32 0.0, %v626
        %628 = vmatmul.f32.gmra.mxu0 %v230
        %v629 = vpop.f32.mrf.mxu0
        %v630 = vadd.f32 0.0, %v629
        %631 = vmatmul.f32.gmra.mxu0 %v233
        %v632 = vpop.f32.mrf.mxu0
        %v633 = vadd.f32 0.0, %v632
        %634 = vmatmul.f32.gmra.mxu0 %v236
        %v635 = vpop.f32.mrf.mxu0
        %v636 = vadd.f32 0.0, %v635
        %637 = vdwg.mxu0
        %s638 = scalar_lea.vmem %s1, 256
        %v639 = vld [vmem:[%s638] sm:$0xff]
        %v640 = vld [vmem:[%s638 + $0x8] sm:$0xff]
        %v641 = vld [vmem:[%s638 + $0x10] sm:$0xff]
        %v642 = vld [vmem:[%s638 + $0x18] sm:$0xff]
        %v643 = vld [vmem:[%s638 + $0x20] sm:$0xff]
        %v644 = vld [vmem:[%s638 + $0x28] sm:$0xff]
        %v645 = vld [vmem:[%s638 + $0x30] sm:$0xff]
        %v646 = vld [vmem:[%s638 + $0x38] sm:$0xff]
        %v647 = vld [vmem:[%s638 + $0x40] sm:$0xff]
        %v648 = vld [vmem:[%s638 + $0x48] sm:$0xff]
        %v649 = vld [vmem:[%s638 + $0x50] sm:$0xff]
        %v650 = vld [vmem:[%s638 + $0x58] sm:$0xff]
        %v651 = vld [vmem:[%s638 + $0x60] sm:$0xff]
        %v652 = vld [vmem:[%s638 + $0x68] sm:$0xff]
        %v653 = vld [vmem:[%s638 + $0x70] sm:$0xff]
        %v654 = vld [vmem:[%s638 + $0x78] sm:$0xff]
        %v656 = vsel %vm213, %v639, 0
        %v659 = vsel %vm213, %v640, 0
        %v662 = vsel %vm213, %v641, 0
        %v665 = vsel %vm213, %v642, 0
        %v668 = vsel %vm213, %v643, 0
        %v671 = vsel %vm213, %v644, 0
        %v674 = vsel %vm213, %v645, 0
        %v677 = vsel %vm213, %v646, 0
        %v680 = vsel %vm213, %v647, 0
        %v683 = vsel %vm213, %v648, 0
        %v686 = vsel %vm213, %v649, 0
        %v689 = vsel %vm213, %v650, 0
        %v692 = vsel %vm213, %v651, 0
        %v695 = vsel %vm213, %v652, 0
        %v698 = vsel %vm213, %v653, 0
        %v701 = vsel %vm213, %v654, 0
        %703 = vmatpush.msra.mxu0 0.0
        %704 = vmatpush.msra.mxu0 0.0
        %705 = vmatpush.msra.mxu0 0.0
        %706 = vmatpush.msra.mxu0 0.0
        %707 = vmatpush.msra.mxu0 0.0
        %708 = vmatpush.msra.mxu0 0.0
        %709 = vmatpush.msra.mxu0 0.0
        %710 = vmatpush.msra.mxu0 0.0
        %711 = vmatpush.msra.mxu0 %v636
        %712 = vmatpush.msra.mxu0 %v633
        %713 = vmatpush.msra.mxu0 %v630
        %714 = vmatpush.msra.mxu0 %v627
        %715 = vmatpush.msra.mxu0 %v624
        %716 = vmatpush.msra.mxu0 %v621
        %717 = vmatpush.msra.mxu0 %v618
        %718 = vmatpush.msra.mxu0 %v615
        %719 = vmatmul.f32.gmra.mxu0 %v656
        %v720 = vpop.f32.mrf.mxu0
        %v721 = vadd.f32 0.0, %v720
        %722 = vmatmul.f32.gmra.mxu0 %v659
        %v723 = vpop.f32.mrf.mxu0
        %v724 = vadd.f32 0.0, %v723
        %725 = vmatmul.f32.gmra.mxu0 %v662
        %v726 = vpop.f32.mrf.mxu0
        %v727 = vadd.f32 0.0, %v726
        %728 = vmatmul.f32.gmra.mxu0 %v665
        %v729 = vpop.f32.mrf.mxu0
        %v730 = vadd.f32 0.0, %v729
        %731 = vmatmul.f32.gmra.mxu0 %v668
        %v732 = vpop.f32.mrf.mxu0
        %v733 = vadd.f32 0.0, %v732
        %734 = vmatmul.f32.gmra.mxu0 %v671
        %v735 = vpop.f32.mrf.mxu0
        %v736 = vadd.f32 0.0, %v735
        %737 = vmatmul.f32.gmra.mxu0 %v674
        %v738 = vpop.f32.mrf.mxu0
        %v739 = vadd.f32 0.0, %v738
        %740 = vmatmul.f32.gmra.mxu0 %v677
        %v741 = vpop.f32.mrf.mxu0
        %v742 = vadd.f32 0.0, %v741
        %743 = vmatmul.f32.gmra.mxu0 %v680
        %v744 = vpop.f32.mrf.mxu0
        %v745 = vadd.f32 0.0, %v744
        %746 = vmatmul.f32.gmra.mxu0 %v683
        %v747 = vpop.f32.mrf.mxu0
        %v748 = vadd.f32 0.0, %v747
        %749 = vmatmul.f32.gmra.mxu0 %v686
        %v750 = vpop.f32.mrf.mxu0
        %v751 = vadd.f32 0.0, %v750
        %752 = vmatmul.f32.gmra.mxu0 %v689
        %v753 = vpop.f32.mrf.mxu0
        %v754 = vadd.f32 0.0, %v753
        %755 = vmatmul.f32.gmra.mxu0 %v692
        %v756 = vpop.f32.mrf.mxu0
        %v757 = vadd.f32 0.0, %v756
        %758 = vmatmul.f32.gmra.mxu0 %v695
        %v759 = vpop.f32.mrf.mxu0
        %v760 = vadd.f32 0.0, %v759
        %761 = vmatmul.f32.gmra.mxu0 %v698
        %v762 = vpop.f32.mrf.mxu0
        %v763 = vadd.f32 0.0, %v762
        %764 = vmatmul.f32.gmra.mxu0 %v701
        %v765 = vpop.f32.mrf.mxu0
        %v766 = vadd.f32 0.0, %v765
        %767 = vdwg.mxu0
        %v768 = vadd.f32 %v541, %v721
        %v769 = vadd.f32 %v544, %v724
        %v770 = vadd.f32 %v547, %v727
        %v771 = vadd.f32 %v550, %v730
        %v772 = vadd.f32 %v553, %v733
        %v773 = vadd.f32 %v556, %v736
        %v774 = vadd.f32 %v559, %v739
        %v775 = vadd.f32 %v562, %v742
        %v776 = vadd.f32 %v565, %v745
        %v777 = vadd.f32 %v568, %v748
        %v778 = vadd.f32 %v571, %v751
        %v779 = vadd.f32 %v574, %v754
        %v780 = vadd.f32 %v577, %v757
        %v781 = vadd.f32 %v580, %v760
        %v782 = vadd.f32 %v583, %v763
        %v783 = vadd.f32 %v586, %v766
        %s784 = sld [smem:[#allocation2]]
        %v785 = vstv %s784
        %v786 = vadd.f32 %v768, %v785
        %v787 = vadd.f32 %v769, %v785
        %v788 = vadd.f32 %v770, %v785
        %v789 = vadd.f32 %v771, %v785
        %v790 = vadd.f32 %v772, %v785
        %v791 = vadd.f32 %v773, %v785
        %v792 = vadd.f32 %v774, %v785
        %v793 = vadd.f32 %v775, %v785
        %v794 = vadd.f32 %v776, %v785
        %v795 = vadd.f32 %v777, %v785
        %v796 = vadd.f32 %v778, %v785
        %v797 = vadd.f32 %v779, %v785
        %v798 = vadd.f32 %v780, %v785
        %v799 = vadd.f32 %v781, %v785
        %v800 = vadd.f32 %v782, %v785
        %v801 = vadd.f32 %v783, %v785
        %802 = vst [vmem:[%s191] sm:$0xff] %v786
        %803 = vst [vmem:[%s191 + $0x8] sm:$0xff] %v787
        %804 = vst [vmem:[%s191 + $0x10] sm:$0xff] %v788
        %805 = vst [vmem:[%s191 + $0x18] sm:$0xff] %v789
        %806 = vst [vmem:[%s191 + $0x20] sm:$0xff] %v790
        %807 = vst [vmem:[%s191 + $0x28] sm:$0xff] %v791
        %808 = vst [vmem:[%s191 + $0x30] sm:$0xff] %v792
        %809 = vst [vmem:[%s191 + $0x38] sm:$0xff] %v793
        %810 = vst [vmem:[%s191 + $0x40] sm:$0xff] %v794
        %811 = vst [vmem:[%s191 + $0x48] sm:$0xff] %v795
        %812 = vst [vmem:[%s191 + $0x50] sm:$0xff] %v796
        %813 = vst [vmem:[%s191 + $0x58] sm:$0xff] %v797
        %814 = vst [vmem:[%s191 + $0x60] sm:$0xff] %v798
        %815 = vst [vmem:[%s191 + $0x68] sm:$0xff] %v799
        %816 = vst [vmem:[%s191 + $0x70] sm:$0xff] %v800
        %817 = vst [vmem:[%s191 + $0x78] sm:$0xff] %v801
        %s818 = sand.u32 %s116, 1
        %s819 = scalar_lea.sflag [#allocation4], %s818
        %s820 = sand.u32 %s116, 1
        %s821 = smul.addr %s820, 128
        %s822 = scalar_lea.vmem [#allocation3], %s821
        // Predicated region
        $region37: #{tpu_custom_call.1} parent=35 // pred_check
          %p823 = pneg %p126
        $region38: #{tpu_custom_call.1} parent=35 // pred_check_branch
          %825 = sbr.rel (%p823) target = $region40
        $region39: #{tpu_custom_call.1} parent=35 // pred_region
          %827 = vsyncadd %s819, 0
          %s828 = smul.addr %s19, 16
          %s829 = smul.addr %s828, 8
          %s830 = scalar_lea.hbm %s4, %s829
          %s831 = sshll.u32 %s822, 4
          %s832 = int_to_ptr.vmem [resolvable:$true] %s831
          %s833 = sshll.u32 %s830, 4
          %s834 = int_to_ptr.hbm [resolvable:$true] %s833
          %839 = dma.vmem_to_hbm [thread:$0]  %s832, 2048, %s834, %s819, 128, 128, 8
        $region40: #{tpu_custom_call.1} parent=35 // pred_fallthru
          _
      $region36: #{tpu_custom_call.1} parent=5 // pred_fallthru
        _
      %p840 = scmp.le.s32.totalorder 2, %s14
      // Predicated region
      $region41: #{tpu_custom_call.1} parent=5 // pred_check
        %p841 = pneg %p840
      $region42: #{tpu_custom_call.1} parent=5 // pred_check_branch
        %843 = sbr.rel (%p841) target = $region44
      $region43: #{tpu_custom_call.1} parent=5 // pred_region
        %s844 = ssub.s32 %s14, 2
        // Predicated region
        $region45: #{tpu_custom_call.1} parent=43 // pred_check
          %p845 = pneg %p132
        $region46: #{tpu_custom_call.1} parent=43 // pred_check_branch
          %847 = sbr.rel (%p845) target = $region48
        $region47: #{tpu_custom_call.1} parent=43 // pred_region
          %s848 = sand.u32 %s117, 1
          %s849 = scalar_lea.sflag [#allocation4], %s848
          %s850 = sand.u32 %s117, 1
          %s851 = smul.addr %s850, 128
          %s852 = scalar_lea.vmem [#allocation3], %s851
          %854 = dma.done %s849, 2048
        $region48: #{tpu_custom_call.1} parent=43 // pred_fallthru
          _
      $region44: #{tpu_custom_call.1} parent=5 // pred_fallthru
        _
    $region6: #{tpu_custom_call.1} parent=1 // loop_footer
      %s18 = sadd.s32 1, %s14
    $region7: #{tpu_custom_call.1} parent=1 // loop_footer_branch
      %13 = sbr.rel target = $region3
    $region8: #{tpu_custom_call.1} parent=1 // loop_exit
      _
    %855 = vsyncpa [#allocation4], 1
    %s856 = scalar_lea.sflag [#allocation4], 1
    %857 = vsyncpa %s856, 1

</llo_original>
